<compile_context>
chip_gen: v5e
topology: v5e:2x2
jax: 0.10.0
libtpu: 0.0.40
codegen_flags: <defaults>
</compile_context>

<pallas_src>
import jax
import jax.numpy as jnp
from jax.experimental import pallas as pl
from jax.experimental.pallas import tpu as pltpu


def _softmax_last(x):
    m = jnp.max(x, axis=-1, keepdims=True)
    e = jnp.exp(x - m)
    # Exact reciprocal: the kernel is HBM-bound, so the EUP-approx variant
    # would only trade accuracy for nothing.
    return e * pl.reciprocal(jnp.sum(e, axis=-1, keepdims=True), approx=False)


def _make_kernel(in_itemsize):
    def kernel(f1_ref, f2_ref, o1_ref, o2_ref):
        # Norm/softmax path always in f32 (correct for bf16 inputs too).
        f1 = f1_ref[...].astype(jnp.float32)
        f2 = f2_ref[...].astype(jnp.float32)

        # torch.cosine_similarity (ATen): dot / sqrt(max(|f1|^2*|f2|^2, eps^2))
        eps = jnp.float32(1e-8)
        dot = jnp.sum(f1 * f2, axis=1, keepdims=True)            # (Bt, 1, HW)
        n1sq = jnp.sum(f1 * f1, axis=1, keepdims=True)           # (Bt, 1, HW)
        n2sq = jnp.sum(f2 * f2, axis=1, keepdims=True)           # (Bt, 1, HW)
        denom = jnp.sqrt(jnp.maximum(n1sq * n2sq, eps * eps))
        sim = dot * pl.reciprocal(denom, approx=False)

        s = _softmax_last(sim)                 # softmax over spatial (H*W)
        # softmax(1 - s) == softmax(-s) (shift invariance): skip the 1-s pass.
        s1 = _softmax_last(-s)

        if in_itemsize < 4:
            # 16-bit inputs: multiply in native dtype so no second full f32
            # tile is live through the store path (halves write-path VMEM).
            o1_ref[...] = f2_ref[...] * s.astype(o1_ref.dtype)   # f1_from_f2
            o2_ref[...] = f1_ref[...] * s1.astype(o2_ref.dtype)  # f2_from_f1
        else:
            o1_ref[...] = (f2 * s).astype(o1_ref.dtype)          # f1_from_f2
            o2_ref[...] = (f1 * s1).astype(o2_ref.dtype)         # f2_from_f1

    return kernel


def _padded_block_bytes(bt, c, hw, itemsize):
    """VMEM footprint of one (bt, c, hw) block after (8,128)/packing padding."""
    lanes = ((hw + 127) // 128) * 128
    bytes_per_lane = ((c * itemsize + 31) // 32) * 32  # sublane granule = 8x32b
    return bt * lanes * bytes_per_lane


def _pick_batch_tile(b, per_elem_bytes, target_bytes=2 << 20):
    """Largest divisor of b with block <= target and >=2 grid steps (if b>=2)."""
    best = 1
    for bt in range(1, b + 1):
        if b % bt != 0:
            continue
        if bt > 1 and bt * per_elem_bytes > target_bytes:
            continue
        if b >= 2 and (b // bt) < 2:
            continue
        best = bt
    return best


def mcm_forward(f1, f2):
    """f1, f2: (B, C, H, W) -> (f1_from_f2, f2_from_f1), both (B, C, H, W)."""
    b, c, h, w = f1.shape
    hw = h * w

    # Free reshapes (contiguous): no extra HBM traffic.
    f1f = f1.reshape(b, c, hw)
    f2f = f2.reshape(b, c, hw)

    itemsize = jnp.dtype(f1.dtype).itemsize
    per_elem_bytes = _padded_block_bytes(1, c, hw, itemsize)  # one batch element
    bt = _pick_batch_tile(b, per_elem_bytes)

    # VMEM budget: 2 inputs + 2 outputs, double-buffered (~8x block) plus the
    # f32 temporaries, with slack.  Clamp to a range safe on every generation
    # (v7x physical VMEM is 64 MiB).
    in_block_bytes = _padded_block_bytes(bt, c, hw, itemsize)
    f32_block_bytes = _padded_block_bytes(bt, c, hw, 4)
    vmem_limit = 8 * in_block_bytes + 6 * f32_block_bytes + (2 << 20)
    vmem_limit = int(min(max(vmem_limit, 16 << 20), 64 << 20))
    # TODO(synk): for very large C*HW on v7x (64 MiB VMEM), split C with an
    # extra "arbitrary" grid axis and accumulate dot/n1sq/n2sq into a
    # (Bt,1,HW) f32 scratch, then apply the softmax weights in a second
    # C-tiled pass.

    kernel = _make_kernel(itemsize)
    # Full-extent (C, HW) block => no 128-alignment requirement, no host pad.
    blk = pl.BlockSpec((bt, c, hw), lambda i: (i, 0, 0))

    out1, out2 = pl.pallas_call(
        kernel,
        out_shape=(
            jax.ShapeDtypeStruct((b, c, hw), f1.dtype),
            jax.ShapeDtypeStruct((b, c, hw), f1.dtype),
        ),
        grid_spec=pltpu.PrefetchScalarGridSpec(
            num_scalar_prefetch=0,
            grid=(b // bt,),
            in_specs=[blk, blk],
            out_specs=[blk, blk],
        ),
        compiler_params=pltpu.CompilerParams(
            dimension_semantics=("parallel",),
            vmem_limit_bytes=vmem_limit,
        ),
    )(f1f, f2f)

    return out1.reshape(b, c, h, w), out2.reshape(b, c, h, w)


def mcm_reference(f1, f2):
    """Pure-JAX reference mirroring the PyTorch module."""
    eps = 1e-8
    dot = jnp.sum(f1 * f2, axis=1)
    n1sq = jnp.sum(f1 * f1, axis=1)
    n2sq = jnp.sum(f2 * f2, axis=1)
    sim = dot / jnp.sqrt(jnp.maximum(n1sq * n2sq, eps * eps))
    b, c, h, w = f1.shape
    sim = sim.reshape(b, 1, h * w)
    sim = jax.nn.softmax(sim, axis=2)
    sim1 = jax.nn.softmax(1.0 - sim, axis=2)
    sim = sim.reshape(b, 1, h, w)
    sim1 = sim1.reshape(b, 1, h, w)
    return f2 * sim, f1 * sim1


if __name__ == "__main__":
    key = jax.random.PRNGKey(0)
    k1, k2 = jax.random.split(key)
    b, c, h, w = 2, 4, 16, 16
    f1 = jax.random.normal(k1, (b, c, h, w), dtype=jnp.float32)
    f2 = jax.random.normal(k2, (b, c, h, w), dtype=jnp.float32)

    o1, o2 = mcm_forward(f1, f2)
    jax.block_until_ready((o1, o2))

    r1, r2 = mcm_reference(f1, f2)
    assert jnp.allclose(o1, r1, atol=1e-5, rtol=1e-5)
    assert jnp.allclose(o2, r2, atol=1e-5, rtol=1e-5)

    print("KERNEL_OK")
</pallas_src>

<mosaic_0001>
module attributes {stable_mosaic.version = 11 : i64} {
  func.func @kernel(%arg0: i32, %arg1: memref<1x4x256xf32, #tpu.memory_space<vmem>>, %arg2: memref<1x4x256xf32, #tpu.memory_space<vmem>>, %arg3: memref<1x4x256xf32, #tpu.memory_space<vmem>>, %arg4: memref<1x4x256xf32, #tpu.memory_space<vmem>>) attributes {dimension_semantics = [#tpu.dimension_semantics<parallel>], iteration_bounds = array<i64: 2>, scalar_prefetch = 0 : i64, scratch_operands = 0 : i64, tpu.core_type = #tpu.core_type<tc>, window_params = [{transform_indices = @transform_0, window_bounds = array<i64: 1, 4, 256>}, {transform_indices = @transform_1, window_bounds = array<i64: 1, 4, 256>}, {transform_indices = @transform_2, window_bounds = array<i64: 1, 4, 256>}, {transform_indices = @transform_3, window_bounds = array<i64: 1, 4, 256>}]} {
    %c0 = arith.constant 0 : index
    %c0_0 = arith.constant 0 : index
    %c0_1 = arith.constant 0 : index
    %0 = vector.load %arg1[%c0, %c0_0, %c0_1] : memref<1x4x256xf32, #tpu.memory_space<vmem>>, vector<1x4x256xf32>
    %c0_2 = arith.constant 0 : index
    %c0_3 = arith.constant 0 : index
    %c0_4 = arith.constant 0 : index
    %1 = vector.load %arg2[%c0_2, %c0_3, %c0_4] : memref<1x4x256xf32, #tpu.memory_space<vmem>>, vector<1x4x256xf32>
    %2 = arith.mulf %0, %1 : vector<1x4x256xf32>
    %cst = arith.constant dense<0.000000e+00> : vector<1x256xf32>
    %3 = vector.multi_reduction <add>, %2, %cst [1] : vector<1x4x256xf32> to vector<1x256xf32>
    %4 = vector.shape_cast %3 : vector<1x256xf32> to vector<1x1x256xf32>
    %5 = arith.mulf %0, %0 : vector<1x4x256xf32>
    %cst_5 = arith.constant dense<0.000000e+00> : vector<1x256xf32>
    %6 = vector.multi_reduction <add>, %5, %cst_5 [1] : vector<1x4x256xf32> to vector<1x256xf32>
    %7 = vector.shape_cast %6 : vector<1x256xf32> to vector<1x1x256xf32>
    %8 = arith.mulf %1, %1 : vector<1x4x256xf32>
    %cst_6 = arith.constant dense<0.000000e+00> : vector<1x256xf32>
    %9 = vector.multi_reduction <add>, %8, %cst_6 [1] : vector<1x4x256xf32> to vector<1x256xf32>
    %10 = vector.shape_cast %9 : vector<1x256xf32> to vector<1x1x256xf32>
    %11 = arith.mulf %7, %10 : vector<1x1x256xf32>
    %cst_7 = arith.constant 9.99999993E-9 : f32
    %cst_8 = arith.constant 9.99999993E-9 : f32
    %12 = arith.mulf %cst_7, %cst_8 : f32
    %13 = vector.broadcast %12 : f32 to vector<1x1x256xf32>
    %14 = arith.maximumf %11, %13 : vector<1x1x256xf32>
    %15 = math.sqrt %14 : vector<1x1x256xf32>
    %16 = tpu.reciprocal %15 : vector<1x1x256xf32> -> vector<1x1x256xf32>
    %17 = arith.mulf %4, %16 : vector<1x1x256xf32>
    %cst_9 = arith.constant dense<0xFF800000> : vector<1x1xf32>
    %18 = vector.multi_reduction <maximumf>, %17, %cst_9 [2] : vector<1x1x256xf32> to vector<1x1xf32>
    %19 = vector.shape_cast %18 : vector<1x1xf32> to vector<1x1x1xf32>
    %20 = vector.broadcast %19 : vector<1x1x1xf32> to vector<1x1x256xf32>
    %21 = arith.subf %17, %20 : vector<1x1x256xf32>
    %22 = math.exp %21 : vector<1x1x256xf32>
    %cst_10 = arith.constant dense<0.000000e+00> : vector<1x1xf32>
    %23 = vector.multi_reduction <add>, %22, %cst_10 [2] : vector<1x1x256xf32> to vector<1x1xf32>
    %24 = vector.shape_cast %23 : vector<1x1xf32> to vector<1x1x1xf32>
    %25 = tpu.reciprocal %24 : vector<1x1x1xf32> -> vector<1x1x1xf32>
    %26 = vector.broadcast %25 : vector<1x1x1xf32> to vector<1x1x256xf32>
    %27 = arith.mulf %22, %26 : vector<1x1x256xf32>
    %cst_11 = arith.constant 0.000000e+00 : f32
    %28 = vector.broadcast %cst_11 : f32 to vector<1x1x256xf32>
    %29 = arith.subf %28, %27 : vector<1x1x256xf32>
    %cst_12 = arith.constant dense<0xFF800000> : vector<1x1xf32>
    %30 = vector.multi_reduction <maximumf>, %29, %cst_12 [2] : vector<1x1x256xf32> to vector<1x1xf32>
    %31 = vector.shape_cast %30 : vector<1x1xf32> to vector<1x1x1xf32>
    %32 = vector.broadcast %31 : vector<1x1x1xf32> to vector<1x1x256xf32>
    %33 = arith.subf %29, %32 : vector<1x1x256xf32>
    %34 = math.exp %33 : vector<1x1x256xf32>
    %cst_13 = arith.constant dense<0.000000e+00> : vector<1x1xf32>
    %35 = vector.multi_reduction <add>, %34, %cst_13 [2] : vector<1x1x256xf32> to vector<1x1xf32>
    %36 = vector.shape_cast %35 : vector<1x1xf32> to vector<1x1x1xf32>
    %37 = tpu.reciprocal %36 : vector<1x1x1xf32> -> vector<1x1x1xf32>
    %38 = vector.broadcast %37 : vector<1x1x1xf32> to vector<1x1x256xf32>
    %39 = arith.mulf %34, %38 : vector<1x1x256xf32>
    %40 = vector.broadcast %27 : vector<1x1x256xf32> to vector<1x4x256xf32>
    %41 = arith.mulf %1, %40 : vector<1x4x256xf32>
    %c0_14 = arith.constant 0 : index
    %c0_15 = arith.constant 0 : index
    %c0_16 = arith.constant 0 : index
    %42 = vector.load %arg3[%c0_14, %c0_15, %c0_16] : memref<1x4x256xf32, #tpu.memory_space<vmem>>, vector<1x4x256xf32>
    tpu.vector_store %arg3[%c0_14, %c0_15, %c0_16], %41 {strides = array<i32>} : memref<1x4x256xf32, #tpu.memory_space<vmem>>, vector<1x4x256xf32>,
    %43 = vector.broadcast %39 : vector<1x1x256xf32> to vector<1x4x256xf32>
    %44 = arith.mulf %0, %43 : vector<1x4x256xf32>
    %c0_17 = arith.constant 0 : index
    %c0_18 = arith.constant 0 : index
    %c0_19 = arith.constant 0 : index
    %45 = vector.load %arg4[%c0_17, %c0_18, %c0_19] : memref<1x4x256xf32, #tpu.memory_space<vmem>>, vector<1x4x256xf32>
    tpu.vector_store %arg4[%c0_17, %c0_18, %c0_19], %44 {strides = array<i32>} : memref<1x4x256xf32, #tpu.memory_space<vmem>>, vector<1x4x256xf32>,
    return
  }
  func.func @transform_0(%arg0: i32) -> (i32, i32, i32) {
    %c0_i32 = arith.constant 0 : i32
    %c0_i32_0 = arith.constant 0 : i32
    %c0_i32_1 = arith.constant 0 : i32
    return %arg0, %c0_i32, %c0_i32_0 : i32, i32, i32
  }
  func.func @transform_1(%arg0: i32) -> (i32, i32, i32) {
    %c0_i32 = arith.constant 0 : i32
    %c0_i32_0 = arith.constant 0 : i32
    %c0_i32_1 = arith.constant 0 : i32
    return %arg0, %c0_i32, %c0_i32_0 : i32, i32, i32
  }
  func.func @transform_2(%arg0: i32) -> (i32, i32, i32) {
    %c0_i32 = arith.constant 0 : i32
    %c0_i32_0 = arith.constant 0 : i32
    %c0_i32_1 = arith.constant 0 : i32
    return %arg0, %c0_i32, %c0_i32_0 : i32, i32, i32
  }
  func.func @transform_3(%arg0: i32) -> (i32, i32, i32) {
    %c0_i32 = arith.constant 0 : i32
    %c0_i32_0 = arith.constant 0 : i32
    %c0_i32_1 = arith.constant 0 : i32
    return %arg0, %c0_i32, %c0_i32_0 : i32, i32, i32
  }
}

</mosaic_0001>

<llo_original>
// kernel: tpu_custom_call.1
$region0: #{tpu_custom_call.1}
  #allocation0 [shape = 'u32[]', space=smem, size = 0x4, offset = 0x4, fixed_abs, tag = 'smem constant byte address 0x4 - core index']
  #allocation1 [shape = 'u32[72,128]{1,0:T(1,128)}', space=vmem, size = 0x9000, scoped, tag = 'internal scratch']
  %s0 = inlined_call_operand.hbm [shape: f32[2,4,256], index: 0, kind: input, shape index: {}]
  %s1 = inlined_call_operand.hbm [shape: f32[2,4,256], index: 1, kind: input, shape index: {}]
  %s2 = inlined_call_operand.hbm [shape: f32[2,4,256], index: 2, kind: output, shape index: {0}]
  %s3 = inlined_call_operand.hbm [shape: f32[2,4,256], index: 3, kind: output, shape index: {1}]
  %4 = xla_tuple %s2, %s3
  %s5 = sld [smem:[#allocation0]]
  $region57: #{tpu_custom_call.1} parent=0
    _
  %s7 = ssub.s32 1, %s5
  %s8 = scalar_select 0, %s7, %s5
  $region1: #{tpu_custom_call.1} parent=0
    #allocation2 [shape = 'u8[8192]{0}', space=vmem, size = 0x2000, scoped, tag = 'input window, operand 0']
    #allocation3 [shape = 's32[2]{0}', space=sflag, size = 0x8, scoped, tag = 'scoped memory for tpu_custom_call.1']
    #allocation4 [shape = 's32[2]{0}', space=sflag, size = 0x8, scoped, tag = 'scoped memory for tpu_custom_call.1']
    #allocation5 [shape = 'u8[8192]{0}', space=vmem, size = 0x2000, scoped, tag = 'input window, operand 1']
    #allocation6 [shape = 's32[2]{0}', space=sflag, size = 0x8, scoped, tag = 'scoped memory for tpu_custom_call.1']
    #allocation7 [shape = 'u8[8192]{0}', space=vmem, size = 0x2000, scoped, tag = 'output window, operand 0']
    #allocation8 [shape = 'u8[8192]{0}', space=vmem, size = 0x2000, scoped, tag = 'output window, operand 1']
    #allocation9 [shape = 's32[2]{0}', space=sflag, size = 0x8, scoped, tag = 'scoped memory for tpu_custom_call.1']
    %9 = vsyncpa [#allocation3], 0
    %s10 = scalar_lea.sflag [#allocation3], 1
    %11 = vsyncpa %s10, 0
    %12 = vsyncpa [#allocation6], 0
    %s13 = scalar_lea.sflag [#allocation6], 1
    %14 = vsyncpa %s13, 0
    %15 = vsyncpa [#allocation4], 0
    %s16 = scalar_lea.sflag [#allocation4], 1
    %17 = vsyncpa %s16, 0
    %18 = vsyncpa [#allocation9], 0
    %s19 = scalar_lea.sflag [#allocation9], 1
    %20 = vsyncpa %s19, 0
    loop: start=0, step=1, limit=4
    $region2: #{tpu_custom_call.1} parent=1 // loop_pre_header
      _
    $region3: #{tpu_custom_call.1} parent=1 // loop_header
      %s22 = sphi 0, %s26
      %p23 = scmp.ge.s32.totalorder %s22, 4
      %s32 = sphi 0, %s34
      %s35 = sphi 0, %s32
      %s36 = sphi 0, %s35
      %s52 = sphi 0, %s36
      %s58 = sphi 0, %s60
      %s61 = sphi 0, %s58
      %s62 = sphi 0, %s61
      %s78 = sphi 0, %s62
      %s84 = sphi 0, %s86
      %s87 = sphi 0, %s84
      %s88 = sphi 0, %s87
      %s104 = sphi 0, %s88
      %s110 = sphi 0, %s112
      %s113 = sphi 0, %s110
      %s114 = sphi 0, %s113
      %s130 = sphi 0, %s114
    $region4: #{tpu_custom_call.1} parent=1 // loop_header_branch
      %25 = sbr.rel (%p23) target = $region8
    $region5: #{tpu_custom_call.1} parent=1 // loop_body
      %s27 = ssub.s32 %s22, 1
      %s28 = ssub.s32 %s22, 2
      %s29 = sadd.s32 %s22, 1
      %s30 = ssub.s32 %s22, %s29
      %p31 = scmp.eq.s32.totalorder %s30, 0
      %s33 = sadd.s32 %s32, 1
      %s34 = scalar_select %p31, %s32, %s33
      %p37 = pneg %p31
      %p38 = scmp.eq.s32.totalorder %s22, 1
      %p39 = por %p37, %p38
      %p40 = scmp.ne.s32.totalorder %s32, %s35
      %p41 = scmp.eq.s32.totalorder %s22, 0
      %p42 = por %p40, %p41
      %p43 = scmp.ne.s32.totalorder %s32, %s35
      %p44 = scmp.eq.s32.totalorder %s27, 1
      %p45 = por %p43, %p44
      %p46 = scmp.ne.s32.totalorder %s35, %s36
      %p47 = scmp.eq.s32.totalorder %s27, 0
      %p48 = por %p46, %p47
      %p49 = scmp.ne.s32.totalorder %s35, %s36
      %p50 = scmp.eq.s32.totalorder %s28, 1
      %p51 = por %p49, %p50
      %p53 = scmp.ne.s32.totalorder %s36, %s52
      %p54 = scmp.eq.s32.totalorder %s28, 0
      %p55 = por %p53, %p54
      %s56 = ssub.s32 %s22, %s29
      %p57 = scmp.eq.s32.totalorder %s56, 0
      %s59 = sadd.s32 %s58, 1
      %s60 = scalar_select %p57, %s58, %s59
      %p63 = pneg %p57
      %p64 = scmp.eq.s32.totalorder %s22, 1
      %p65 = por %p63, %p64
      %p66 = scmp.ne.s32.totalorder %s58, %s61
      %p67 = scmp.eq.s32.totalorder %s22, 0
      %p68 = por %p66, %p67
      %p69 = scmp.ne.s32.totalorder %s58, %s61
      %p70 = scmp.eq.s32.totalorder %s27, 1
      %p71 = por %p69, %p70
      %p72 = scmp.ne.s32.totalorder %s61, %s62
      %p73 = scmp.eq.s32.totalorder %s27, 0
      %p74 = por %p72, %p73
      %p75 = scmp.ne.s32.totalorder %s61, %s62
      %p76 = scmp.eq.s32.totalorder %s28, 1
      %p77 = por %p75, %p76
      %p79 = scmp.ne.s32.totalorder %s62, %s78
      %p80 = scmp.eq.s32.totalorder %s28, 0
      %p81 = por %p79, %p80
      %s82 = ssub.s32 %s22, %s29
      %p83 = scmp.eq.s32.totalorder %s82, 0
      %s85 = sadd.s32 %s84, 1
      %s86 = scalar_select %p83, %s84, %s85
      %p89 = pneg %p83
      %p90 = scmp.eq.s32.totalorder %s22, 1
      %p91 = por %p89, %p90
      %p92 = scmp.ne.s32.totalorder %s84, %s87
      %p93 = scmp.eq.s32.totalorder %s22, 0
      %p94 = por %p92, %p93
      %p95 = scmp.ne.s32.totalorder %s84, %s87
      %p96 = scmp.eq.s32.totalorder %s27, 1
      %p97 = por %p95, %p96
      %p98 = scmp.ne.s32.totalorder %s87, %s88
      %p99 = scmp.eq.s32.totalorder %s27, 0
      %p100 = por %p98, %p99
      %p101 = scmp.ne.s32.totalorder %s87, %s88
      %p102 = scmp.eq.s32.totalorder %s28, 1
      %p103 = por %p101, %p102
      %p105 = scmp.ne.s32.totalorder %s88, %s104
      %p106 = scmp.eq.s32.totalorder %s28, 0
      %p107 = por %p105, %p106
      %s108 = ssub.s32 %s22, %s29
      %p109 = scmp.eq.s32.totalorder %s108, 0
      %s111 = sadd.s32 %s110, 1
      %s112 = scalar_select %p109, %s110, %s111
      %p115 = pneg %p109
      %p116 = scmp.eq.s32.totalorder %s22, 1
      %p117 = por %p115, %p116
      %p118 = scmp.ne.s32.totalorder %s110, %s113
      %p119 = scmp.eq.s32.totalorder %s22, 0
      %p120 = por %p118, %p119
      %p121 = scmp.ne.s32.totalorder %s110, %s113
      %p122 = scmp.eq.s32.totalorder %s27, 1
      %p123 = por %p121, %p122
      %p124 = scmp.ne.s32.totalorder %s113, %s114
      %p125 = scmp.eq.s32.totalorder %s27, 0
      %p126 = por %p124, %p125
      %p127 = scmp.ne.s32.totalorder %s113, %s114
      %p128 = scmp.eq.s32.totalorder %s28, 1
      %p129 = por %p127, %p128
      %p131 = scmp.ne.s32.totalorder %s114, %s130
      %p132 = scmp.eq.s32.totalorder %s28, 0
      %p133 = por %p131, %p132
      %p134 = scmp.le.s32.totalorder 1, %s22
      %p135 = scmp.lt.s32.totalorder %s22, 3
      %p136 = pnand %p134, %p135
      %p137 = pneg %p136
      // Predicated region
      $region9: #{tpu_custom_call.1} parent=5 // pred_check
        _
      $region10: #{tpu_custom_call.1} parent=5 // pred_check_branch
        %139 = sbr.rel (%p136) target = $region12
      $region11: #{tpu_custom_call.1} parent=5 // pred_region
        %s140 = ssub.s32 %s22, 1
      $region12: #{tpu_custom_call.1} parent=5 // pred_fallthru
        _
      %p141 = scmp.lt.s32.totalorder %s22, 2
      // Predicated region
      $region13: #{tpu_custom_call.1} parent=5 // pred_check
        %p142 = pneg %p141
      $region14: #{tpu_custom_call.1} parent=5 // pred_check_branch
        %144 = sbr.rel (%p142) target = $region16
      $region15: #{tpu_custom_call.1} parent=5 // pred_region
        // Predicated region
        $region17: #{tpu_custom_call.1} parent=15 // pred_check
          %p145 = pneg %p42
        $region18: #{tpu_custom_call.1} parent=15 // pred_check_branch
          %147 = sbr.rel (%p145) target = $region20
        $region19: #{tpu_custom_call.1} parent=15 // pred_region
          %s148 = sand.u32 %s32, 1
          %s149 = scalar_lea.sflag [#allocation3], %s148
          %s150 = sand.u32 %s32, 1
          %s151 = smul.addr %s150, 8
          %s152 = scalar_lea.vmem [#allocation2], %s151
          %154 = vsyncadd %s149, 0
          %s155 = smul.addr %s22, 2
          %s156 = smul.addr %s155, 4
          %s157 = scalar_lea.hbm %s0, %s156
          %s159 = sshll.u32 %s157, 4
          %s160 = int_to_ptr.hbm [resolvable:$true] %s159
          %s161 = sshll.u32 %s152, 4
          %s162 = int_to_ptr.vmem [resolvable:$true] %s161
          %164 = dma.hbm_to_vmem [thread:$0]  %s160, 128, %s162, %s149
        $region20: #{tpu_custom_call.1} parent=15 // pred_fallthru
          _
        // Predicated region
        $region21: #{tpu_custom_call.1} parent=15 // pred_check
          %p165 = pneg %p68
        $region22: #{tpu_custom_call.1} parent=15 // pred_check_branch
          %167 = sbr.rel (%p165) target = $region24
        $region23: #{tpu_custom_call.1} parent=15 // pred_region
          %s168 = sand.u32 %s58, 1
          %s169 = scalar_lea.sflag [#allocation6], %s168
          %s170 = sand.u32 %s58, 1
          %s171 = smul.addr %s170, 8
          %s172 = scalar_lea.vmem [#allocation5], %s171
          %174 = vsyncadd %s169, 0
          %s175 = smul.addr %s22, 2
          %s176 = smul.addr %s175, 4
          %s177 = scalar_lea.hbm %s1, %s176
          %s179 = sshll.u32 %s177, 4
          %s180 = int_to_ptr.hbm [resolvable:$true] %s179
          %s181 = sshll.u32 %s172, 4
          %s182 = int_to_ptr.vmem [resolvable:$true] %s181
          %184 = dma.hbm_to_vmem [thread:$0]  %s180, 128, %s182, %s169
        $region24: #{tpu_custom_call.1} parent=15 // pred_fallthru
          _
      $region16: #{tpu_custom_call.1} parent=5 // pred_fallthru
        _
      %p185 = scmp.le.s32.totalorder 1, %s22
      %p186 = scmp.lt.s32.totalorder %s22, 3
      %p187 = pnand %p185, %p186
      %p188 = pneg %p187
      // Predicated region
      $region25: #{tpu_custom_call.1} parent=5 // pred_check
        _
      $region26: #{tpu_custom_call.1} parent=5 // pred_check_branch
        %190 = sbr.rel (%p187) target = $region28
      $region27: #{tpu_custom_call.1} parent=5 // pred_region
        %s191 = ssub.s32 %s22, 1
        %s192 = sand.u32 %s35, 1
        %s193 = scalar_lea.sflag [#allocation3], %s192
        %s194 = sand.u32 %s35, 1
        %s195 = smul.addr %s194, 8
        %s196 = scalar_lea.vmem [#allocation2], %s195
        // Predicated region
        $region29: #{tpu_custom_call.1} parent=27 // pred_check
          %p197 = pneg %p48
        $region30: #{tpu_custom_call.1} parent=27 // pred_check_branch
          %199 = sbr.rel (%p197) target = $region32
        $region31: #{tpu_custom_call.1} parent=27 // pred_region
          %201 = dma.done %s193, 128
        $region32: #{tpu_custom_call.1} parent=27 // pred_fallthru
          _
        %s202 = sand.u32 %s61, 1
        %s203 = scalar_lea.sflag [#allocation6], %s202
        %s204 = sand.u32 %s61, 1
        %s205 = smul.addr %s204, 8
        %s206 = scalar_lea.vmem [#allocation5], %s205
        // Predicated region
        $region33: #{tpu_custom_call.1} parent=27 // pred_check
          %p207 = pneg %p74
        $region34: #{tpu_custom_call.1} parent=27 // pred_check_branch
          %209 = sbr.rel (%p207) target = $region36
        $region35: #{tpu_custom_call.1} parent=27 // pred_region
          %211 = dma.done %s203, 128
        $region36: #{tpu_custom_call.1} parent=27 // pred_fallthru
          _
        %s212 = sand.u32 %s35, 1
        %s213 = scalar_lea.sflag [#allocation3], %s212
        %s214 = sand.u32 %s35, 1
        %s215 = smul.addr %s214, 8
        %s216 = scalar_lea.vmem [#allocation2], %s215
        %p217 = pneg %p48
        %p218 = pneg %p45
        %s219 = sand.u32 %s61, 1
        %s220 = scalar_lea.sflag [#allocation6], %s219
        %s221 = sand.u32 %s61, 1
        %s222 = smul.addr %s221, 8
        %s223 = scalar_lea.vmem [#allocation5], %s222
        %p224 = pneg %p74
        %p225 = pneg %p71
        %p226 = pneg %p100
        %p227 = pneg %p97
        %s228 = sand.u32 %s87, 1
        %s229 = scalar_lea.sflag [#allocation4], %s228
        %s230 = sand.u32 %s87, 1
        %s231 = smul.addr %s230, 8
        %s232 = scalar_lea.vmem [#allocation7], %s231
        %p233 = pneg %p126
        %p234 = pneg %p123
        %s235 = sand.u32 %s113, 1
        %s236 = scalar_lea.sflag [#allocation9], %s235
        %s237 = sand.u32 %s113, 1
        %s238 = smul.addr %s237, 8
        %s239 = scalar_lea.vmem [#allocation8], %s238
        %v240 = vld [vmem:[%s196] sm:$0xff]
        %v241 = vld [vmem:[%s206] sm:$0xff]
        %v242 = vmul.f32 %v240, %v241
        %244 = vst [vmem:[#allocation1] ss:$2 sm:$0xff] %v242
        %v245 = vld.sshfl [vmem:[#allocation1] sm:$0xff pattern:$0x75316420]
        %v246 = vld.sshfl [vmem:[#allocation1 + $0x8] sm:$0xff pattern:$0x75316420]
        %vm249 = vcmask 1043456
        %v250 = vsel %vm249, %v245, 0.0
        %v251 = vrot.slane %v250, 4
        %v252 = vadd.f32 %v250, %v251
        %v253 = vrot.slane %v252, 2
        %v254 = vadd.f32 %v252, %v253
        %v255 = vrot.slane %v254, 1
        %v256 = vadd.f32 %v254, %v255
        %v257 = vsel %vm249, %v246, 0.0
        %v258 = vrot.slane %v257, 4
        %v259 = vadd.f32 %v257, %v258
        %v260 = vrot.slane %v259, 2
        %v261 = vadd.f32 %v259, %v260
        %v262 = vrot.slane %v261, 1
        %v263 = vadd.f32 %v261, %v262
        %v264 = vmul.f32 %v240, %v240
        %266 = vst [vmem:[#allocation1] ss:$2 sm:$0xff] %v264
        %v267 = vld.sshfl [vmem:[#allocation1] sm:$0xff pattern:$0x75316420]
        %v268 = vld.sshfl [vmem:[#allocation1 + $0x8] sm:$0xff pattern:$0x75316420]
        %v271 = vsel %vm249, %v267, 0.0
        %v272 = vrot.slane %v271, 4
        %v273 = vadd.f32 %v271, %v272
        %v274 = vrot.slane %v273, 2
        %v275 = vadd.f32 %v273, %v274
        %v276 = vrot.slane %v275, 1
        %v277 = vadd.f32 %v275, %v276
        %v278 = vsel %vm249, %v268, 0.0
        %v279 = vrot.slane %v278, 4
        %v280 = vadd.f32 %v278, %v279
        %v281 = vrot.slane %v280, 2
        %v282 = vadd.f32 %v280, %v281
        %v283 = vrot.slane %v282, 1
        %v284 = vadd.f32 %v282, %v283
        %v285 = vmul.f32 %v241, %v241
        %287 = vst [vmem:[#allocation1] ss:$2 sm:$0xff] %v285
        %v288 = vld.sshfl [vmem:[#allocation1] sm:$0xff pattern:$0x75316420]
        %v289 = vld.sshfl [vmem:[#allocation1 + $0x8] sm:$0xff pattern:$0x75316420]
        %v292 = vsel %vm249, %v288, 0.0
        %v293 = vrot.slane %v292, 4
        %v294 = vadd.f32 %v292, %v293
        %v295 = vrot.slane %v294, 2
        %v296 = vadd.f32 %v294, %v295
        %v297 = vrot.slane %v296, 1
        %v298 = vadd.f32 %v296, %v297
        %v299 = vsel %vm249, %v289, 0.0
        %v300 = vrot.slane %v299, 4
        %v301 = vadd.f32 %v299, %v300
        %v302 = vrot.slane %v301, 2
        %v303 = vadd.f32 %v301, %v302
        %v304 = vrot.slane %v303, 1
        %v305 = vadd.f32 %v303, %v304
        %v306 = vmul.f32 %v277, %v298
        %v307 = vmul.f32 %v284, %v305
        %v308 = vmax.f32 %v306, 1e-16
        %v309 = vmax.f32 %v307, 1e-16
        %v310 = vrsqrt.pop %v308
        %v311 = vmul.f32 %v310, %v308
        %v312 = vmul.f32 %v311, %v310
        %v313 = vmul.f32 0.5, %v312
        %v314 = vsub.f32 1.5, %v313
        %v315 = vmul.f32 %v310, %v314
        %v316 = vmul.f32 %v308, %v315
        %vm317 = vcmp.eq.f32.partialorder %v308, inf
        %v318 = vsel %vm317, %v308, %v316
        %vm319 = vcmp.eq.f32.partialorder %v308, 0.0
        %v320 = vand.u32 %v308, 2147483648
        %v321 = vsel %vm319, %v320, %v318
        %v322 = vrsqrt.pop %v309
        %v323 = vmul.f32 %v322, %v309
        %v324 = vmul.f32 %v323, %v322
        %v325 = vmul.f32 0.5, %v324
        %v326 = vsub.f32 1.5, %v325
        %v327 = vmul.f32 %v322, %v326
        %v328 = vmul.f32 %v309, %v327
        %vm329 = vcmp.eq.f32.partialorder %v309, inf
        %v330 = vsel %vm329, %v309, %v328
        %vm331 = vcmp.eq.f32.partialorder %v309, 0.0
        %v332 = vand.u32 %v309, 2147483648
        %v333 = vsel %vm331, %v332, %v330
        %v334 = vrcp.pop %v321
        %v335 = vmul.f32 %v321, %v334
        %v336 = vsub.f32 1.0, %v335
        %v337 = vmul.f32 %v334, %v336
        %v338 = vadd.f32 %v334, %v337
        %vm339 = vweird.f32 %v321
        %vm340 = vweird.f32 %v334
        %vm341 = vmor %vm339, %vm340
        %v342 = vsel %vm341, %v334, %v338
        %v343 = vand.u32 2147483647, %v321
        %vm344 = vcmp.eq.f32.partialorder %v343, 8.507059e+37
        %v345 = vand.u32 %v321, 2147483648
        %v346 = vor.u32 1.1754944e-38, %v345
        %v347 = vsel %vm344, %v346, %v342
        %v348 = vrcp.pop %v333
        %v349 = vmul.f32 %v333, %v348
        %v350 = vsub.f32 1.0, %v349
        %v351 = vmul.f32 %v348, %v350
        %v352 = vadd.f32 %v348, %v351
        %vm353 = vweird.f32 %v333
        %vm354 = vweird.f32 %v348
        %vm355 = vmor %vm353, %vm354
        %v356 = vsel %vm355, %v348, %v352
        %v357 = vand.u32 2147483647, %v333
        %vm358 = vcmp.eq.f32.partialorder %v357, 8.507059e+37
        %v359 = vand.u32 %v333, 2147483648
        %v360 = vor.u32 1.1754944e-38, %v359
        %v361 = vsel %vm358, %v360, %v356
        %v362 = vmul.f32 %v256, %v347
        %v363 = vmul.f32 %v263, %v361
        %v364 = vmax.f32 %v362, %v363
        %365 = vmax.xlane.f32.xlu0 %v364
        %v366 = vpop.xlane.xlu0 %365
        %v367 = vsub.f32 %v362, %v366
        %v368 = vsub.f32 %v363, %v366
        %v369 = vmul.f32 %v367, 1.442695
        %v370 = vpow.pop %v369
        %v371 = vmul.f32 %v368, 1.442695
        %v372 = vpow.pop %v371
        %v373 = vadd.f32 %v370, %v372
        %374 = vadd.xlane.f32.xlu0 %v373
        %v375 = vpop.xlane.xlu0 %374
        %v376 = vrcp.pop %v375
        %v377 = vmul.f32 %v375, %v376
        %v378 = vsub.f32 1.0, %v377
        %v379 = vmul.f32 %v376, %v378
        %v380 = vadd.f32 %v376, %v379
        %vm381 = vweird.f32 %v375
        %vm382 = vweird.f32 %v376
        %vm383 = vmor %vm381, %vm382
        %v384 = vsel %vm383, %v376, %v380
        %v385 = vand.u32 2147483647, %v375
        %vm386 = vcmp.eq.f32.partialorder %v385, 8.507059e+37
        %v387 = vand.u32 %v375, 2147483648
        %v388 = vor.u32 1.1754944e-38, %v387
        %v389 = vsel %vm386, %v388, %v384
        %v390 = vmul.f32 %v370, %v389
        %v391 = vmul.f32 %v372, %v389
        %v392 = vsub.f32 0.0, %v390
        %v393 = vsub.f32 0.0, %v391
        %v394 = vmax.f32 %v392, %v393
        %395 = vmax.xlane.f32.xlu0 %v394
        %v396 = vpop.xlane.xlu0 %395
        %v397 = vsub.f32 %v392, %v396
        %v398 = vsub.f32 %v393, %v396
        %v399 = vmul.f32 %v397, 1.442695
        %v400 = vpow.pop %v399
        %v401 = vmul.f32 %v398, 1.442695
        %v402 = vpow.pop %v401
        %v403 = vadd.f32 %v400, %v402
        %404 = vadd.xlane.f32.xlu0 %v403
        %v405 = vpop.xlane.xlu0 %404
        %v406 = vrcp.pop %v405
        %v407 = vmul.f32 %v405, %v406
        %v408 = vsub.f32 1.0, %v407
        %v409 = vmul.f32 %v406, %v408
        %v410 = vadd.f32 %v406, %v409
        %vm411 = vweird.f32 %v405
        %vm412 = vweird.f32 %v406
        %vm413 = vmor %vm411, %vm412
        %v414 = vsel %vm413, %v406, %v410
        %v415 = vand.u32 2147483647, %v405
        %vm416 = vcmp.eq.f32.partialorder %v415, 8.507059e+37
        %v417 = vand.u32 %v405, 2147483648
        %v418 = vor.u32 1.1754944e-38, %v417
        %v419 = vsel %vm416, %v418, %v414
        %v420 = vmul.f32 %v400, %v419
        %v421 = vmul.f32 %v402, %v419
        %v424 = vrot.slane %v391, 4
        %v425 = vsel %vm249, %v390, %v424
        %v427 = vmul.f32 %v241, %v425
        %428 = vst [vmem:[%s232] sm:$0xff] %v427
        %v431 = vrot.slane %v421, 4
        %v432 = vsel %vm249, %v420, %v431
        %v434 = vmul.f32 %v240, %v432
        %435 = vst [vmem:[%s239] sm:$0xff] %v434
        %s436 = sand.u32 %s87, 1
        %s437 = scalar_lea.sflag [#allocation4], %s436
        %s438 = sand.u32 %s87, 1
        %s439 = smul.addr %s438, 8
        %s440 = scalar_lea.vmem [#allocation7], %s439
        %s441 = sand.u32 %s113, 1
        %s442 = scalar_lea.sflag [#allocation9], %s441
        %s443 = sand.u32 %s113, 1
        %s444 = smul.addr %s443, 8
        %s445 = scalar_lea.vmem [#allocation8], %s444
        // Predicated region
        $region37: #{tpu_custom_call.1} parent=27 // pred_check
          %p446 = pneg %p97
        $region38: #{tpu_custom_call.1} parent=27 // pred_check_branch
          %448 = sbr.rel (%p446) target = $region40
        $region39: #{tpu_custom_call.1} parent=27 // pred_region
          %450 = vsyncadd %s437, 0
          %s451 = smul.addr %s27, 2
          %s452 = smul.addr %s451, 4
          %s453 = scalar_lea.hbm %s2, %s452
          %s455 = sshll.u32 %s440, 4
          %s456 = int_to_ptr.vmem [resolvable:$true] %s455
          %s457 = sshll.u32 %s453, 4
          %s458 = int_to_ptr.hbm [resolvable:$true] %s457
          %460 = dma.vmem_to_hbm [thread:$0]  %s456, 128, %s458, %s437
        $region40: #{tpu_custom_call.1} parent=27 // pred_fallthru
          _
        // Predicated region
        $region41: #{tpu_custom_call.1} parent=27 // pred_check
          %p461 = pneg %p123
        $region42: #{tpu_custom_call.1} parent=27 // pred_check_branch
          %463 = sbr.rel (%p461) target = $region44
        $region43: #{tpu_custom_call.1} parent=27 // pred_region
          %465 = vsyncadd %s442, 0
          %s466 = smul.addr %s27, 2
          %s467 = smul.addr %s466, 4
          %s468 = scalar_lea.hbm %s3, %s467
          %s470 = sshll.u32 %s445, 4
          %s471 = int_to_ptr.vmem [resolvable:$true] %s470
          %s472 = sshll.u32 %s468, 4
          %s473 = int_to_ptr.hbm [resolvable:$true] %s472
          %475 = dma.vmem_to_hbm [thread:$0]  %s471, 128, %s473, %s442
        $region44: #{tpu_custom_call.1} parent=27 // pred_fallthru
          _
      $region28: #{tpu_custom_call.1} parent=5 // pred_fallthru
        _
      %p476 = scmp.le.s32.totalorder 2, %s22
      // Predicated region
      $region45: #{tpu_custom_call.1} parent=5 // pred_check
        %p477 = pneg %p476
      $region46: #{tpu_custom_call.1} parent=5 // pred_check_branch
        %479 = sbr.rel (%p477) target = $region48
      $region47: #{tpu_custom_call.1} parent=5 // pred_region
        %s480 = ssub.s32 %s22, 2
        // Predicated region
        $region49: #{tpu_custom_call.1} parent=47 // pred_check
          %p481 = pneg %p103
        $region50: #{tpu_custom_call.1} parent=47 // pred_check_branch
          %483 = sbr.rel (%p481) target = $region52
        $region51: #{tpu_custom_call.1} parent=47 // pred_region
          %s484 = sand.u32 %s88, 1
          %s485 = scalar_lea.sflag [#allocation4], %s484
          %s486 = sand.u32 %s88, 1
          %s487 = smul.addr %s486, 8
          %s488 = scalar_lea.vmem [#allocation7], %s487
          %490 = dma.done %s485, 128
        $region52: #{tpu_custom_call.1} parent=47 // pred_fallthru
          _
        // Predicated region
        $region53: #{tpu_custom_call.1} parent=47 // pred_check
          %p491 = pneg %p129
        $region54: #{tpu_custom_call.1} parent=47 // pred_check_branch
          %493 = sbr.rel (%p491) target = $region56
        $region55: #{tpu_custom_call.1} parent=47 // pred_region
          %s494 = sand.u32 %s114, 1
          %s495 = scalar_lea.sflag [#allocation9], %s494
          %s496 = sand.u32 %s114, 1
          %s497 = smul.addr %s496, 8
          %s498 = scalar_lea.vmem [#allocation8], %s497
          %500 = dma.done %s495, 128
        $region56: #{tpu_custom_call.1} parent=47 // pred_fallthru
          _
      $region48: #{tpu_custom_call.1} parent=5 // pred_fallthru
        _
    $region6: #{tpu_custom_call.1} parent=1 // loop_footer
      %s26 = sadd.s32 1, %s22
    $region7: #{tpu_custom_call.1} parent=1 // loop_footer_branch
      %21 = sbr.rel target = $region3
    $region8: #{tpu_custom_call.1} parent=1 // loop_exit
      _
    %501 = vsyncpa [#allocation3], 1
    %s502 = scalar_lea.sflag [#allocation3], 1
    %503 = vsyncpa %s502, 1
    %504 = vsyncpa [#allocation6], 1
    %s505 = scalar_lea.sflag [#allocation6], 1
    %506 = vsyncpa %s505, 1
    %507 = vsyncpa [#allocation4], 1
    %s508 = scalar_lea.sflag [#allocation4], 1
    %509 = vsyncpa %s508, 1
    %510 = vsyncpa [#allocation9], 1
    %s511 = scalar_lea.sflag [#allocation9], 1
    %512 = vsyncpa %s511, 1

</llo_original>
